<compile_context>
chip_gen: v5e
topology: v5e:2x2
jax: 0.10.0
libtpu: 0.0.40
codegen_flags: <defaults>
</compile_context>

<pallas_src>
import functools
import math

import jax
import jax.numpy as jnp
from jax.experimental import pallas as pl
from jax.experimental.pallas import tpu as pltpu


def _interacting_kernel(x_ref, w_ref, o_ref, *,
                        head_num, att_size, field_size, emb,
                        batch_tile, scaling, use_res):
    # x_ref: (BT*F, E) rows of field embeddings for BT samples.
    # w_ref: (E, nW*E) fused [W_Query | W_key | W_Value | (W_Res)] weights.
    x = x_ref[...].astype(jnp.float32)

    # Single lane-dense projection matmul: (BT*F, E) @ (E, nW*E).
    proj = jnp.dot(x, w_ref[...], preferred_element_type=jnp.float32)

    # Lane-slice q/k/v/(res) and restore a per-sample leading batch dim.
    # Splitting the leading row dim keeps the minor (lane) dim unchanged -> cheap.
    def take(i):
        return proj[:, i * emb:(i + 1) * emb].reshape(batch_tile, field_size, emb)

    q = take(0)
    k = take(1)
    v = take(2)

    inv_sqrt_d = 1.0 / (att_size ** 0.5)
    head_outs = []
    for h in range(head_num):                          # static unroll over heads
        sl = slice(h * att_size, (h + 1) * att_size)
        qh = q[..., sl]                                 # (BT, F, D)
        kh = k[..., sl]
        vh = v[..., sl]

        # Batched scores: contract the trailing D axes directly (no kh.T transpose).
        scores = jnp.einsum('bid,bjd->bij', qh, kh,
                            preferred_element_type=jnp.float32)    # (BT, F, F)
        if scaling:
            scores = scores * inv_sqrt_d

        # Numerically-stable softmax along the key axis.
        m = jnp.max(scores, axis=-1, keepdims=True)
        e = jnp.exp(scores - m)
        attn = e * pl.reciprocal(jnp.sum(e, axis=-1, keepdims=True), approx=True)

        head_outs.append(
            jnp.einsum('bij,bjd->bid', attn, vh,
                       preferred_element_type=jnp.float32))        # (BT, F, D)

    out = jnp.concatenate(head_outs, axis=-1)                       # (BT, F, E)

    if use_res:
        out = out + take(3)                                         # residual projection

    out = jnp.maximum(out, 0.0)
    o_ref[...] = out.reshape(batch_tile * field_size, emb).astype(o_ref.dtype)


def interacting_layer(inputs, w_query, w_key, w_value, w_res=None,
                      head_num=2, use_res=True, scaling=True,
                      batch_tile=128):
    """AutoInt InteractingLayer forward.

    inputs:  (B, F, E) float32
    weights: (E, E) each
    returns: (B, F, E)
    """
    B, F, E = inputs.shape
    assert E % head_num == 0
    D = E // head_num

    # Fuse the projection weights into one lane-dense (E, nW*E) matrix.
    ws = [w_query, w_key, w_value]
    if use_res:
        assert w_res is not None
        ws.append(w_res)
    w_all = jnp.concatenate(ws, axis=1)
    nW = len(ws)

    # Batch tile: many samples per grid step (target >= 1024 rows), with a
    # sublane-aligned row count per block.  Pad batch to a multiple of the tile.
    bt = max(1, min(batch_tile, B))
    step = 8 // math.gcd(F, 8)
    bt = ((bt + step - 1) // step) * step
    Bp = ((B + bt - 1) // bt) * bt

    # Present inputs/outputs as 2-D (rows, E) slabs; blocks are (bt*F, E) row tiles.
    x2 = inputs.reshape(B * F, E)
    if Bp != B:
        x2 = jnp.pad(x2, ((0, (Bp - B) * F), (0, 0)))

    kernel = functools.partial(
        _interacting_kernel,
        head_num=head_num, att_size=D, field_size=F, emb=E,
        batch_tile=bt, scaling=scaling, use_res=use_res,
    )

    cost = pl.CostEstimate(
        flops=int(2 * Bp * F * E * nW * E                    # fused projection
                  + 2 * Bp * head_num * F * F * D * 2),      # scores + attn @ V
        transcendentals=int(Bp * head_num * F * F),          # exp in softmax
        bytes_accessed=int(4 * (2 * Bp * F * E + E * nW * E)),
    )

    out2 = pl.pallas_call(
        kernel,
        out_shape=jax.ShapeDtypeStruct((Bp * F, E), inputs.dtype),
        grid_spec=pltpu.PrefetchScalarGridSpec(
            num_scalar_prefetch=0,
            grid=(Bp // bt,),
            in_specs=[
                pl.BlockSpec((bt * F, E), lambda b: (b, 0)),   # x row tile for this batch tile
                pl.BlockSpec((E, nW * E), lambda b: (0, 0)),   # weights: constant index -> resident
            ],
            out_specs=pl.BlockSpec((bt * F, E), lambda b: (b, 0)),
        ),
        compiler_params=pltpu.CompilerParams(
            dimension_semantics=("parallel",)),
        cost_estimate=cost,
    )(x2, w_all)

    out = out2.reshape(Bp, F, E)
    if Bp != B:
        out = out[:B]
    return out


def _reference(inputs, w_query, w_key, w_value, w_res,
               head_num=2, use_res=True, scaling=True):
    """Pure-JAX transcription of the PyTorch forward for verification."""
    B, F, E = inputs.shape
    D = E // head_num
    q = jnp.einsum('bfe,eo->bfo', inputs, w_query)
    k = jnp.einsum('bfe,eo->bfo', inputs, w_key)
    v = jnp.einsum('bfe,eo->bfo', inputs, w_value)
    # stack(split(..., D, dim=2)) -> (H, B, F, D)
    q = jnp.stack(jnp.split(q, head_num, axis=2))
    k = jnp.stack(jnp.split(k, head_num, axis=2))
    v = jnp.stack(jnp.split(v, head_num, axis=2))
    scores = jnp.einsum('hbik,hbjk->hbij', q, k)
    if scaling:
        scores = scores / (D ** 0.5)
    attn = jax.nn.softmax(scores, axis=-1)
    res = jnp.einsum('hbij,hbjd->hbid', attn, v)               # (H, B, F, D)
    res = jnp.concatenate(jnp.split(res, head_num, axis=0), axis=-1)[0]  # (B, F, E)
    if use_res:
        res = res + jnp.einsum('bfe,eo->bfo', inputs, w_res)
    return jax.nn.relu(res)


if __name__ == "__main__":
    B, F, E, H = 2, 8, 32, 2

    key = jax.random.PRNGKey(0)
    kx, kq, kk, kv, kr = jax.random.split(key, 5)

    x = jax.random.normal(kx, (B, F, E), dtype=jnp.float32)
    # nn.init.normal_(mean=0.0, std=0.05) equivalents, deterministic:
    w_query = 0.05 * jax.random.normal(kq, (E, E), dtype=jnp.float32)
    w_key = 0.05 * jax.random.normal(kk, (E, E), dtype=jnp.float32)
    w_value = 0.05 * jax.random.normal(kv, (E, E), dtype=jnp.float32)
    w_res = 0.05 * jax.random.normal(kr, (E, E), dtype=jnp.float32)

    out = interacting_layer(x, w_query, w_key, w_value, w_res,
                            head_num=H, use_res=True, scaling=True)
    out = jax.block_until_ready(out)

    ref = _reference(x, w_query, w_key, w_value, w_res,
                     head_num=H, use_res=True, scaling=True)

    assert out.shape == (B, F, E)
    # Tolerance slightly loosened for pl.reciprocal(approx=True) in the softmax.
    assert jnp.allclose(out, ref, atol=2e-3, rtol=2e-3), "mismatch vs reference"
    print("KERNEL_OK")
</pallas_src>

<mosaic_0001>
module attributes {stable_mosaic.version = 11 : i64} {
  func.func @_interacting_kernel(%arg0: i32, %arg1: memref<16x32xf32, #tpu.memory_space<vmem>>, %arg2: memref<32x128xf32, #tpu.memory_space<vmem>>, %arg3: memref<16x32xf32, #tpu.memory_space<vmem>>) attributes {dimension_semantics = [#tpu.dimension_semantics<parallel>], iteration_bounds = array<i64: 1>, scalar_prefetch = 0 : i64, scratch_operands = 0 : i64, tpu.core_type = #tpu.core_type<tc>, window_params = [{transform_indices = @transform_0, window_bounds = array<i64: 16, 32>}, {pipeline_mode = #tpu.pipeline_mode<synchronous>, transform_indices = @transform_1, window_bounds = array<i64: 32, 128>}, {transform_indices = @transform_2, window_bounds = array<i64: 16, 32>}]} {
    %c0 = arith.constant 0 : index
    %c0_0 = arith.constant 0 : index
    %0 = vector.load %arg1[%c0, %c0_0] : memref<16x32xf32, #tpu.memory_space<vmem>>, vector<16x32xf32>
    %c0_1 = arith.constant 0 : index
    %c0_2 = arith.constant 0 : index
    %1 = vector.load %arg2[%c0_1, %c0_2] : memref<32x128xf32, #tpu.memory_space<vmem>>, vector<32x128xf32>
    %cst = arith.constant dense<0.000000e+00> : vector<16x128xf32>
    %2 = tpu.matmul %0, %1, %cst {dimension_numbers = #tpu.dot_dimension_numbers<[1], [0], [0], [1], [0, 0, 1, 1], [], []>} : vector<16x32xf32>, vector<32x128xf32>, vector<16x128xf32> -> vector<16x128xf32>
    %3 = vector.extract_strided_slice %2 {offsets = [0, 0], sizes = [16, 32], strides = [1, 1]} : vector<16x128xf32> to vector<16x32xf32>
    %4 = vector.shape_cast %3 : vector<16x32xf32> to vector<2x8x32xf32>
    %5 = vector.extract_strided_slice %2 {offsets = [0, 32], sizes = [16, 32], strides = [1, 1]} : vector<16x128xf32> to vector<16x32xf32>
    %6 = vector.shape_cast %5 : vector<16x32xf32> to vector<2x8x32xf32>
    %7 = vector.extract_strided_slice %2 {offsets = [0, 64], sizes = [16, 32], strides = [1, 1]} : vector<16x128xf32> to vector<16x32xf32>
    %8 = vector.shape_cast %7 : vector<16x32xf32> to vector<2x8x32xf32>
    %9 = vector.extract_strided_slice %4 {offsets = [0, 0, 0], sizes = [2, 8, 16], strides = [1, 1, 1]} : vector<2x8x32xf32> to vector<2x8x16xf32>
    %10 = vector.extract_strided_slice %6 {offsets = [0, 0, 0], sizes = [2, 8, 16], strides = [1, 1, 1]} : vector<2x8x32xf32> to vector<2x8x16xf32>
    %11 = vector.extract_strided_slice %8 {offsets = [0, 0, 0], sizes = [2, 8, 16], strides = [1, 1, 1]} : vector<2x8x32xf32> to vector<2x8x16xf32>
    "tpu.trace_start"() <{level = 10 : i32, message = "bid,bjd->bij"}> : () -> ()
    %cst_3 = arith.constant dense<0.000000e+00> : vector<2x8x8xf32>
    %12 = tpu.matmul %9, %10, %cst_3 {dimension_numbers = #tpu.dot_dimension_numbers<[2], [2], [1], [1], [0, 0, 0, 1, 1, 1], [0], [0]>} : vector<2x8x16xf32>, vector<2x8x16xf32>, vector<2x8x8xf32> -> vector<2x8x8xf32>
    "tpu.trace_stop"() : () -> ()
    %cst_4 = arith.constant 2.500000e-01 : f32
    %13 = vector.broadcast %cst_4 : f32 to vector<2x8x8xf32>
    %14 = arith.mulf %12, %13 : vector<2x8x8xf32>
    %cst_5 = arith.constant dense<0xFF800000> : vector<2x8xf32>
    %15 = vector.multi_reduction <maximumf>, %14, %cst_5 [2] : vector<2x8x8xf32> to vector<2x8xf32>
    %16 = vector.shape_cast %15 : vector<2x8xf32> to vector<2x8x1xf32>
    %17 = vector.broadcast %16 : vector<2x8x1xf32> to vector<2x8x8xf32>
    %18 = arith.subf %14, %17 : vector<2x8x8xf32>
    %19 = math.exp %18 : vector<2x8x8xf32>
    %cst_6 = arith.constant dense<0.000000e+00> : vector<2x8xf32>
    %20 = vector.multi_reduction <add>, %19, %cst_6 [2] : vector<2x8x8xf32> to vector<2x8xf32>
    %21 = vector.shape_cast %20 : vector<2x8xf32> to vector<2x8x1xf32>
    %22 = tpu.reciprocal %21 {approx = true} : vector<2x8x1xf32> -> vector<2x8x1xf32>
    %23 = vector.broadcast %22 : vector<2x8x1xf32> to vector<2x8x8xf32>
    %24 = arith.mulf %19, %23 : vector<2x8x8xf32>
    "tpu.trace_start"() <{level = 10 : i32, message = "bij,bjd->bid"}> : () -> ()
    %cst_7 = arith.constant dense<0.000000e+00> : vector<2x8x16xf32>
    %25 = tpu.matmul %24, %11, %cst_7 {dimension_numbers = #tpu.dot_dimension_numbers<[2], [1], [1], [2], [0, 0, 0, 1, 1, 2], [0], [0]>} : vector<2x8x8xf32>, vector<2x8x16xf32>, vector<2x8x16xf32> -> vector<2x8x16xf32>
    "tpu.trace_stop"() : () -> ()
    %26 = vector.extract_strided_slice %4 {offsets = [0, 0, 16], sizes = [2, 8, 16], strides = [1, 1, 1]} : vector<2x8x32xf32> to vector<2x8x16xf32>
    %27 = vector.extract_strided_slice %6 {offsets = [0, 0, 16], sizes = [2, 8, 16], strides = [1, 1, 1]} : vector<2x8x32xf32> to vector<2x8x16xf32>
    %28 = vector.extract_strided_slice %8 {offsets = [0, 0, 16], sizes = [2, 8, 16], strides = [1, 1, 1]} : vector<2x8x32xf32> to vector<2x8x16xf32>
    "tpu.trace_start"() <{level = 10 : i32, message = "bid,bjd->bij"}> : () -> ()
    %cst_8 = arith.constant dense<0.000000e+00> : vector<2x8x8xf32>
    %29 = tpu.matmul %26, %27, %cst_8 {dimension_numbers = #tpu.dot_dimension_numbers<[2], [2], [1], [1], [0, 0, 0, 1, 1, 1], [0], [0]>} : vector<2x8x16xf32>, vector<2x8x16xf32>, vector<2x8x8xf32> -> vector<2x8x8xf32>
    "tpu.trace_stop"() : () -> ()
    %cst_9 = arith.constant 2.500000e-01 : f32
    %30 = vector.broadcast %cst_9 : f32 to vector<2x8x8xf32>
    %31 = arith.mulf %29, %30 : vector<2x8x8xf32>
    %cst_10 = arith.constant dense<0xFF800000> : vector<2x8xf32>
    %32 = vector.multi_reduction <maximumf>, %31, %cst_10 [2] : vector<2x8x8xf32> to vector<2x8xf32>
    %33 = vector.shape_cast %32 : vector<2x8xf32> to vector<2x8x1xf32>
    %34 = vector.broadcast %33 : vector<2x8x1xf32> to vector<2x8x8xf32>
    %35 = arith.subf %31, %34 : vector<2x8x8xf32>
    %36 = math.exp %35 : vector<2x8x8xf32>
    %cst_11 = arith.constant dense<0.000000e+00> : vector<2x8xf32>
    %37 = vector.multi_reduction <add>, %36, %cst_11 [2] : vector<2x8x8xf32> to vector<2x8xf32>
    %38 = vector.shape_cast %37 : vector<2x8xf32> to vector<2x8x1xf32>
    %39 = tpu.reciprocal %38 {approx = true} : vector<2x8x1xf32> -> vector<2x8x1xf32>
    %40 = vector.broadcast %39 : vector<2x8x1xf32> to vector<2x8x8xf32>
    %41 = arith.mulf %36, %40 : vector<2x8x8xf32>
    "tpu.trace_start"() <{level = 10 : i32, message = "bij,bjd->bid"}> : () -> ()
    %cst_12 = arith.constant dense<0.000000e+00> : vector<2x8x16xf32>
    %42 = tpu.matmul %41, %28, %cst_12 {dimension_numbers = #tpu.dot_dimension_numbers<[2], [1], [1], [2], [0, 0, 0, 1, 1, 2], [0], [0]>} : vector<2x8x8xf32>, vector<2x8x16xf32>, vector<2x8x16xf32> -> vector<2x8x16xf32>
    "tpu.trace_stop"() : () -> ()
    %43 = tpu.concatenate %25, %42 in 2 : vector<2x8x16xf32>, vector<2x8x16xf32> -> vector<2x8x32xf32>
    %44 = vector.extract_strided_slice %2 {offsets = [0, 96], sizes = [16, 32], strides = [1, 1]} : vector<16x128xf32> to vector<16x32xf32>
    %45 = vector.shape_cast %44 : vector<16x32xf32> to vector<2x8x32xf32>
    %46 = arith.addf %43, %45 : vector<2x8x32xf32>
    %cst_13 = arith.constant 0.000000e+00 : f32
    %47 = vector.broadcast %cst_13 : f32 to vector<2x8x32xf32>
    %48 = arith.maximumf %46, %47 : vector<2x8x32xf32>
    %49 = vector.shape_cast %48 : vector<2x8x32xf32> to vector<16x32xf32>
    %c0_14 = arith.constant 0 : index
    %c0_15 = arith.constant 0 : index
    %50 = vector.load %arg3[%c0_14, %c0_15] : memref<16x32xf32, #tpu.memory_space<vmem>>, vector<16x32xf32>
    tpu.vector_store %arg3[%c0_14, %c0_15], %49 {strides = array<i32>} : memref<16x32xf32, #tpu.memory_space<vmem>>, vector<16x32xf32>,
    return
  }
  func.func @transform_0(%arg0: i32) -> (i32, i32) {
    %c0_i32 = arith.constant 0 : i32
    %c0_i32_0 = arith.constant 0 : i32
    return %arg0, %c0_i32 : i32, i32
  }
  func.func @transform_1(%arg0: i32) -> (i32, i32) {
    %c0_i32 = arith.constant 0 : i32
    %c0_i32_0 = arith.constant 0 : i32
    %c0_i32_1 = arith.constant 0 : i32
    return %c0_i32, %c0_i32_0 : i32, i32
  }
  func.func @transform_2(%arg0: i32) -> (i32, i32) {
    %c0_i32 = arith.constant 0 : i32
    %c0_i32_0 = arith.constant 0 : i32
    return %arg0, %c0_i32 : i32, i32
  }
}

</mosaic_0001>

<llo_original>
// kernel: tpu_custom_call.1
$region0: #{tpu_custom_call.1}
  #allocation0 [shape = 'u32[]', space=smem, size = 0x4, offset = 0x4, fixed_abs, tag = 'smem constant byte address 0x4 - core index']
  #allocation1 [shape = 'u32[72,128]{1,0:T(1,128)}', space=vmem, size = 0x9000, scoped, tag = 'internal scratch']
  %s0 = inlined_call_operand.hbm [shape: f32[16,32], index: 0, kind: input, shape index: {}]
  %s1 = inlined_call_operand.hbm [shape: f32[32,128], index: 1, kind: input, shape index: {}]
  %s2 = inlined_call_operand.hbm [shape: f32[16,32], index: 2, kind: output, shape index: {}]
  %s3 = sld [smem:[#allocation0]]
  $region26: #{tpu_custom_call.1} parent=0
    _
  %s5 = ssub.s32 1, %s3
  %s6 = scalar_select 0, %s5, %s3
  $region1: #{tpu_custom_call.1} parent=0
    #allocation2 [shape = 'u8[8192]{0}', space=vmem, size = 0x2000, scoped, tag = 'input window, operand 0, single buffered']
    #allocation3 [shape = 's32[1]{0}', space=sflag, size = 0x4, scoped, tag = 'scoped memory for tpu_custom_call.1']
    #allocation4 [shape = 's32[1]{0}', space=sflag, size = 0x4, scoped, tag = 'scoped memory for tpu_custom_call.1']
    #allocation5 [shape = 'u8[16384]{0}', space=vmem, size = 0x4000, scoped, tag = 'input window, operand 1, single buffered']
    #allocation6 [shape = 's32[1]{0}', space=sflag, size = 0x4, scoped, tag = 'scoped memory for tpu_custom_call.1']
    #allocation7 [shape = 'u8[8192]{0}', space=vmem, size = 0x2000, scoped, tag = 'output window, operand 0, single buffered']
    %7 = vsyncpa [#allocation3], 0
    %8 = vsyncpa [#allocation6], 0
    %9 = vsyncpa [#allocation4], 0
    // Predicated region
    $region2: #{tpu_custom_call.1} parent=1 // pred_check
      _
    $region3: #{tpu_custom_call.1} parent=1 // pred_check_branch
      %11 = sbr.rel (0) target = $region5
    $region4: #{tpu_custom_call.1} parent=1 // pred_region
      %13 = vsyncadd [#allocation3], 0
      %s14 = sshll.u32 %s0, 4
      %s15 = int_to_ptr.hbm [resolvable:$true] %s14
      %s16 = sshll.u32 [#allocation2], 4
      %s17 = int_to_ptr.vmem [resolvable:$true] %s16
      %22 = dma.hbm_to_vmem [thread:$0]  %s15, 256, %s17, [#allocation3], 128, 128, 8
    $region5: #{tpu_custom_call.1} parent=1 // pred_fallthru
      _
    // Predicated region
    $region6: #{tpu_custom_call.1} parent=1 // pred_check
      _
    $region7: #{tpu_custom_call.1} parent=1 // pred_check_branch
      %24 = sbr.rel (0) target = $region9
    $region8: #{tpu_custom_call.1} parent=1 // pred_region
      %26 = vsyncadd [#allocation6], 0
      %s27 = sshll.u32 %s1, 4
      %s28 = int_to_ptr.hbm [resolvable:$true] %s27
      %s29 = sshll.u32 [#allocation5], 4
      %s30 = int_to_ptr.vmem [resolvable:$true] %s29
      %35 = dma.hbm_to_vmem [thread:$0]  %s28, 512, %s30, [#allocation6], 128, 128, 8
    $region9: #{tpu_custom_call.1} parent=1 // pred_fallthru
      _
    // Predicated region
    $region10: #{tpu_custom_call.1} parent=1 // pred_check
      _
    $region11: #{tpu_custom_call.1} parent=1 // pred_check_branch
      %37 = sbr.rel (0) target = $region13
    $region12: #{tpu_custom_call.1} parent=1 // pred_region
      %39 = dma.done [#allocation3], 256
    $region13: #{tpu_custom_call.1} parent=1 // pred_fallthru
      _
    // Predicated region
    $region14: #{tpu_custom_call.1} parent=1 // pred_check
      _
    $region15: #{tpu_custom_call.1} parent=1 // pred_check_branch
      %41 = sbr.rel (0) target = $region17
    $region16: #{tpu_custom_call.1} parent=1 // pred_region
      %43 = dma.done [#allocation6], 512
    $region17: #{tpu_custom_call.1} parent=1 // pred_fallthru
      _
    %v44 = vld [vmem:[#allocation2] sm:$0xff]
    %v45 = vld [vmem:[#allocation2 + $0x8] sm:$0xff]
    %v46 = vld [vmem:[#allocation5] sm:$0xff]
    %v47 = vld [vmem:[#allocation5 + $0x8] sm:$0xff]
    %v48 = vld [vmem:[#allocation5 + $0x10] sm:$0xff]
    %v49 = vld [vmem:[#allocation5 + $0x18] sm:$0xff]
    %vm50 = vcmask 261120
    %v52 = vsel %vm50, %v44, 0
    %v55 = vsel %vm50, %v45, 0
    %57 = vmatpush.msra.mxu0 0.0
    %58 = vmatpush.msra.mxu0 0.0
    %59 = vmatpush.msra.mxu0 0.0
    %60 = vmatpush.msra.mxu0 0.0
    %61 = vmatpush.msra.mxu0 0.0
    %62 = vmatpush.msra.mxu0 0.0
    %63 = vmatpush.msra.mxu0 0.0
    %64 = vmatpush.msra.mxu0 0.0
    %65 = vmatpush.msra.mxu0 0.0
    %66 = vmatpush.msra.mxu0 0.0
    %67 = vmatpush.msra.mxu0 0.0
    %68 = vmatpush.msra.mxu0 0.0
    %69 = vmatpush.msra.mxu0 %v49
    %70 = vmatpush.msra.mxu0 %v48
    %71 = vmatpush.msra.mxu0 %v47
    %72 = vmatpush.msra.mxu0 %v46
    %73 = vmatmul.f32.gmra.mxu0 %v52
    %v74 = vpop.f32.mrf.mxu0
    %v75 = vadd.f32 0.0, %v74
    %76 = vmatmul.f32.gmra.mxu0 %v55
    %v77 = vpop.f32.mrf.mxu0
    %v78 = vadd.f32 0.0, %v77
    %79 = vdwg.mxu0
    %81 = vrot.lane.b32.xlu0 %v75, 96
    %v82 = vpop.permute.xlu0 %81
    %vm83 = vcmask 130048
    %v84 = vsel %vm83, %v75, 0
    %v86 = vsel %vm83, %v82, 0
    %88 = vmatpush.xpose.msra.mxu0 0.0
    %89 = vmatpush.xpose.msra.mxu0 0.0
    %90 = vmatpush.xpose.msra.mxu0 0.0
    %91 = vmatpush.xpose.msra.mxu0 0.0
    %92 = vmatpush.xpose.msra.mxu0 0.0
    %93 = vmatpush.xpose.msra.mxu0 0.0
    %94 = vmatpush.xpose.msra.mxu0 0.0
    %95 = vmatpush.xpose.msra.mxu0 0.0
    %96 = vmatpush.xpose.msra.mxu0 0.0
    %97 = vmatpush.xpose.msra.mxu0 0.0
    %98 = vmatpush.xpose.msra.mxu0 0.0
    %99 = vmatpush.xpose.msra.mxu0 0.0
    %100 = vmatpush.xpose.msra.mxu0 0.0
    %101 = vmatpush.xpose.msra.mxu0 0.0
    %102 = vmatpush.xpose.msra.mxu0 0.0
    %103 = vmatpush.xpose.msra.mxu0 %v86
    %104 = vmatmul.f32.gmra.mxu0 %v84
    %v105 = vpop.f32.mrf.mxu0
    %v106 = vadd.f32 0.0, %v105
    %107 = vdwg.mxu0
    %109 = vrot.lane.b32.xlu0 %v78, 96
    %v110 = vpop.permute.xlu0 %109
    %v111 = vsel %vm83, %v78, 0
    %v113 = vsel %vm83, %v110, 0
    %115 = vmatpush.xpose.msra.mxu0 0.0
    %116 = vmatpush.xpose.msra.mxu0 0.0
    %117 = vmatpush.xpose.msra.mxu0 0.0
    %118 = vmatpush.xpose.msra.mxu0 0.0
    %119 = vmatpush.xpose.msra.mxu0 0.0
    %120 = vmatpush.xpose.msra.mxu0 0.0
    %121 = vmatpush.xpose.msra.mxu0 0.0
    %122 = vmatpush.xpose.msra.mxu0 0.0
    %123 = vmatpush.xpose.msra.mxu0 0.0
    %124 = vmatpush.xpose.msra.mxu0 0.0
    %125 = vmatpush.xpose.msra.mxu0 0.0
    %126 = vmatpush.xpose.msra.mxu0 0.0
    %127 = vmatpush.xpose.msra.mxu0 0.0
    %128 = vmatpush.xpose.msra.mxu0 0.0
    %129 = vmatpush.xpose.msra.mxu0 0.0
    %130 = vmatpush.xpose.msra.mxu0 %v113
    %131 = vmatmul.f32.gmra.mxu0 %v111
    %v132 = vpop.f32.mrf.mxu0
    %v133 = vadd.f32 0.0, %v132
    %134 = vdwg.mxu0
    %v135 = vmul.f32 %v106, 0.25
    %v136 = vmul.f32 %v133, 0.25
    %vm137 = vcmask 64512
    %v138 = vsel %vm137, %v135, -inf
    %139 = vmax.xlane.f32.xlu0 %v138
    %v140 = vpop.xlane.xlu0 %139
    %v141 = vsel %vm137, %v136, -inf
    %142 = vmax.xlane.f32.xlu0 %v141
    %v143 = vpop.xlane.xlu0 %142
    %v144 = vsub.f32 %v135, %v140
    %v145 = vsub.f32 %v136, %v143
    %v146 = vmul.f32 %v144, 1.442695
    %v147 = vpow.pop %v146
    %v148 = vmul.f32 %v145, 1.442695
    %v149 = vpow.pop %v148
    %v150 = vsel %vm137, %v147, 0.0
    %151 = vadd.xlane.f32.xlu0 %v150
    %v152 = vpop.xlane.xlu0 %151
    %v153 = vsel %vm137, %v149, 0.0
    %154 = vadd.xlane.f32.xlu0 %v153
    %v155 = vpop.xlane.xlu0 %154
    %v156 = vrcp.pop %v152
    %v157 = vrcp.pop %v155
    %v158 = vmul.f32 %v147, %v156
    %v159 = vmul.f32 %v149, %v157
    %160 = vrot.lane.b32.xlu0 %v75, 64
    %v161 = vpop.permute.xlu0 %160
    %v164 = vsel %vm137, %v158, 0
    %166 = vmatpush.msra.mxu0 0.0
    %167 = vmatpush.msra.mxu0 0.0
    %168 = vmatpush.msra.mxu0 0.0
    %169 = vmatpush.msra.mxu0 0.0
    %170 = vmatpush.msra.mxu0 0.0
    %171 = vmatpush.msra.mxu0 0.0
    %172 = vmatpush.msra.mxu0 0.0
    %173 = vmatpush.msra.mxu0 0.0
    %174 = vmatpush.msra.mxu0 0.0
    %175 = vmatpush.msra.mxu0 0.0
    %176 = vmatpush.msra.mxu0 0.0
    %177 = vmatpush.msra.mxu0 0.0
    %178 = vmatpush.msra.mxu0 0.0
    %179 = vmatpush.msra.mxu0 0.0
    %180 = vmatpush.msra.mxu0 0.0
    %181 = vmatpush.msra.mxu0 %v161
    %182 = vmatmul.f32.gmra.mxu0 %v164
    %v183 = vpop.f32.mrf.mxu0
    %v184 = vadd.f32 0.0, %v183
    %185 = vdwg.mxu0
    %186 = vrot.lane.b32.xlu0 %v78, 64
    %v187 = vpop.permute.xlu0 %186
    %v190 = vsel %vm137, %v159, 0
    %192 = vmatpush.msra.mxu0 0.0
    %193 = vmatpush.msra.mxu0 0.0
    %194 = vmatpush.msra.mxu0 0.0
    %195 = vmatpush.msra.mxu0 0.0
    %196 = vmatpush.msra.mxu0 0.0
    %197 = vmatpush.msra.mxu0 0.0
    %198 = vmatpush.msra.mxu0 0.0
    %199 = vmatpush.msra.mxu0 0.0
    %200 = vmatpush.msra.mxu0 0.0
    %201 = vmatpush.msra.mxu0 0.0
    %202 = vmatpush.msra.mxu0 0.0
    %203 = vmatpush.msra.mxu0 0.0
    %204 = vmatpush.msra.mxu0 0.0
    %205 = vmatpush.msra.mxu0 0.0
    %206 = vmatpush.msra.mxu0 0.0
    %207 = vmatpush.msra.mxu0 %v187
    %208 = vmatmul.f32.gmra.mxu0 %v190
    %v209 = vpop.f32.mrf.mxu0
    %v210 = vadd.f32 0.0, %v209
    %211 = vdwg.mxu0
    %212 = vrot.lane.b32.xlu0 %v75, 112
    %v213 = vpop.permute.xlu0 %212
    %214 = vrot.lane.b32.xlu0 %v75, 80
    %v215 = vpop.permute.xlu0 %214
    %v216 = vsel %vm83, %v213, 0
    %v218 = vsel %vm83, %v215, 0
    %220 = vmatpush.xpose.msra.mxu0 0.0
    %221 = vmatpush.xpose.msra.mxu0 0.0
    %222 = vmatpush.xpose.msra.mxu0 0.0
    %223 = vmatpush.xpose.msra.mxu0 0.0
    %224 = vmatpush.xpose.msra.mxu0 0.0
    %225 = vmatpush.xpose.msra.mxu0 0.0
    %226 = vmatpush.xpose.msra.mxu0 0.0
    %227 = vmatpush.xpose.msra.mxu0 0.0
    %228 = vmatpush.xpose.msra.mxu0 0.0
    %229 = vmatpush.xpose.msra.mxu0 0.0
    %230 = vmatpush.xpose.msra.mxu0 0.0
    %231 = vmatpush.xpose.msra.mxu0 0.0
    %232 = vmatpush.xpose.msra.mxu0 0.0
    %233 = vmatpush.xpose.msra.mxu0 0.0
    %234 = vmatpush.xpose.msra.mxu0 0.0
    %235 = vmatpush.xpose.msra.mxu0 %v218
    %236 = vmatmul.f32.gmra.mxu0 %v216
    %v237 = vpop.f32.mrf.mxu0
    %v238 = vadd.f32 0.0, %v237
    %239 = vdwg.mxu0
    %240 = vrot.lane.b32.xlu0 %v78, 112
    %v241 = vpop.permute.xlu0 %240
    %242 = vrot.lane.b32.xlu0 %v78, 80
    %v243 = vpop.permute.xlu0 %242
    %v244 = vsel %vm83, %v241, 0
    %v246 = vsel %vm83, %v243, 0
    %248 = vmatpush.xpose.msra.mxu0 0.0
    %249 = vmatpush.xpose.msra.mxu0 0.0
    %250 = vmatpush.xpose.msra.mxu0 0.0
    %251 = vmatpush.xpose.msra.mxu0 0.0
    %252 = vmatpush.xpose.msra.mxu0 0.0
    %253 = vmatpush.xpose.msra.mxu0 0.0
    %254 = vmatpush.xpose.msra.mxu0 0.0
    %255 = vmatpush.xpose.msra.mxu0 0.0
    %256 = vmatpush.xpose.msra.mxu0 0.0
    %257 = vmatpush.xpose.msra.mxu0 0.0
    %258 = vmatpush.xpose.msra.mxu0 0.0
    %259 = vmatpush.xpose.msra.mxu0 0.0
    %260 = vmatpush.xpose.msra.mxu0 0.0
    %261 = vmatpush.xpose.msra.mxu0 0.0
    %262 = vmatpush.xpose.msra.mxu0 0.0
    %263 = vmatpush.xpose.msra.mxu0 %v246
    %264 = vmatmul.f32.gmra.mxu0 %v244
    %v265 = vpop.f32.mrf.mxu0
    %v266 = vadd.f32 0.0, %v265
    %267 = vdwg.mxu0
    %v268 = vmul.f32 %v238, 0.25
    %v269 = vmul.f32 %v266, 0.25
    %v270 = vsel %vm137, %v268, -inf
    %271 = vmax.xlane.f32.xlu0 %v270
    %v272 = vpop.xlane.xlu0 %271
    %v273 = vsel %vm137, %v269, -inf
    %274 = vmax.xlane.f32.xlu0 %v273
    %v275 = vpop.xlane.xlu0 %274
    %v276 = vsub.f32 %v268, %v272
    %v277 = vsub.f32 %v269, %v275
    %v278 = vmul.f32 %v276, 1.442695
    %v279 = vpow.pop %v278
    %v280 = vmul.f32 %v277, 1.442695
    %v281 = vpow.pop %v280
    %v282 = vsel %vm137, %v279, 0.0
    %283 = vadd.xlane.f32.xlu0 %v282
    %v284 = vpop.xlane.xlu0 %283
    %v285 = vsel %vm137, %v281, 0.0
    %286 = vadd.xlane.f32.xlu0 %v285
    %v287 = vpop.xlane.xlu0 %286
    %v288 = vrcp.pop %v284
    %v289 = vrcp.pop %v287
    %v290 = vmul.f32 %v279, %v288
    %v291 = vmul.f32 %v281, %v289
    %292 = vrot.lane.b32.xlu0 %v75, 48
    %v293 = vpop.permute.xlu0 %292
    %v296 = vsel %vm137, %v290, 0
    %298 = vmatpush.msra.mxu0 0.0
    %299 = vmatpush.msra.mxu0 0.0
    %300 = vmatpush.msra.mxu0 0.0
    %301 = vmatpush.msra.mxu0 0.0
    %302 = vmatpush.msra.mxu0 0.0
    %303 = vmatpush.msra.mxu0 0.0
    %304 = vmatpush.msra.mxu0 0.0
    %305 = vmatpush.msra.mxu0 0.0
    %306 = vmatpush.msra.mxu0 0.0
    %307 = vmatpush.msra.mxu0 0.0
    %308 = vmatpush.msra.mxu0 0.0
    %309 = vmatpush.msra.mxu0 0.0
    %310 = vmatpush.msra.mxu0 0.0
    %311 = vmatpush.msra.mxu0 0.0
    %312 = vmatpush.msra.mxu0 0.0
    %313 = vmatpush.msra.mxu0 %v293
    %314 = vmatmul.f32.gmra.mxu0 %v296
    %v315 = vpop.f32.mrf.mxu0
    %v316 = vadd.f32 0.0, %v315
    %317 = vdwg.mxu0
    %318 = vrot.lane.b32.xlu0 %v78, 48
    %v319 = vpop.permute.xlu0 %318
    %v322 = vsel %vm137, %v291, 0
    %324 = vmatpush.msra.mxu0 0.0
    %325 = vmatpush.msra.mxu0 0.0
    %326 = vmatpush.msra.mxu0 0.0
    %327 = vmatpush.msra.mxu0 0.0
    %328 = vmatpush.msra.mxu0 0.0
    %329 = vmatpush.msra.mxu0 0.0
    %330 = vmatpush.msra.mxu0 0.0
    %331 = vmatpush.msra.mxu0 0.0
    %332 = vmatpush.msra.mxu0 0.0
    %333 = vmatpush.msra.mxu0 0.0
    %334 = vmatpush.msra.mxu0 0.0
    %335 = vmatpush.msra.mxu0 0.0
    %336 = vmatpush.msra.mxu0 0.0
    %337 = vmatpush.msra.mxu0 0.0
    %338 = vmatpush.msra.mxu0 0.0
    %339 = vmatpush.msra.mxu0 %v319
    %340 = vmatmul.f32.gmra.mxu0 %v322
    %v341 = vpop.f32.mrf.mxu0
    %v342 = vadd.f32 0.0, %v341
    %343 = vdwg.mxu0
    %346 = vrot.lane.b32.xlu0 %v316, 16
    %v347 = vpop.permute.xlu0 %346
    %348 = vrot.lane.b32.xlu0 %v342, 16
    %v349 = vpop.permute.xlu0 %348
    %v352 = vsel %vm83, %v184, %v347
    %v353 = vsel %vm83, %v210, %v349
    %354 = vrot.lane.b32.xlu0 %v75, 32
    %v355 = vpop.permute.xlu0 %354
    %356 = vrot.lane.b32.xlu0 %v78, 32
    %v357 = vpop.permute.xlu0 %356
    %v360 = vadd.f32 %v352, %v355
    %v361 = vadd.f32 %v353, %v357
    %v362 = vmax.f32 %v360, 0.0
    %v363 = vmax.f32 %v361, 0.0
    %364 = vst.msk [vmem:[#allocation7] sm:$0xff] %vm50, %v362
    %365 = vst.msk [vmem:[#allocation7 + $0x8] sm:$0xff] %vm50, %v363
    // Predicated region
    $region18: #{tpu_custom_call.1} parent=1 // pred_check
      _
    $region19: #{tpu_custom_call.1} parent=1 // pred_check_branch
      %367 = sbr.rel (0) target = $region21
    $region20: #{tpu_custom_call.1} parent=1 // pred_region
      %369 = vsyncadd [#allocation4], 0
      %s370 = sshll.u32 [#allocation7], 4
      %s371 = int_to_ptr.vmem [resolvable:$true] %s370
      %s372 = sshll.u32 %s2, 4
      %s373 = int_to_ptr.hbm [resolvable:$true] %s372
      %378 = dma.vmem_to_hbm [thread:$0]  %s371, 256, %s373, [#allocation4], 128, 128, 8
    $region21: #{tpu_custom_call.1} parent=1 // pred_fallthru
      _
    // Predicated region
    $region22: #{tpu_custom_call.1} parent=1 // pred_check
      _
    $region23: #{tpu_custom_call.1} parent=1 // pred_check_branch
      %380 = sbr.rel (0) target = $region25
    $region24: #{tpu_custom_call.1} parent=1 // pred_region
      %382 = dma.done [#allocation4], 256
    $region25: #{tpu_custom_call.1} parent=1 // pred_fallthru
      _
    %383 = vsyncpa [#allocation3], 1
    %384 = vsyncpa [#allocation6], 1
    %385 = vsyncpa [#allocation4], 1

</llo_original>
